<compile_context>
chip_gen: v5e
topology: v5e:2x2
jax: 0.10.0
libtpu: 0.0.40
codegen_flags: <defaults>
</compile_context>

<pallas_src>
import functools
import math

import jax
import jax.numpy as jnp
import numpy as np
from jax import lax
from jax.experimental import pallas as pl
from jax.experimental.pallas import tpu as pltpu


def _spatial_attn_kernel(x_ref, wm_ref, o_ref, *, C, roll_shifts):
    # x_ref : (TB, C, N)  batch tile, spatial dims flattened onto lanes
    # wm_ref: (2*T, N)    per-tap weight*valid-mask rows (max-plane, avg-plane)
    # o_ref : (TB, N)     sigmoid(conv) output, lane-dense
    x = x_ref[...].astype(jnp.float32)
    x_max = jnp.max(x, axis=1)                 # (TB, N)  channel max
    x_avg = jnp.sum(x, axis=1) * (1.0 / C)     # (TB, N)  channel mean
    wm = wm_ref[...]                           # (2*T, N)

    acc = jnp.zeros_like(x_max)
    # Fully unrolled: K is small and static.  Each tap is one lane rotate per
    # plane (XLU) plus two multiply-adds (VPU); the halo/padding is already
    # baked into the wm rows as zeros.
    for t, r in enumerate(roll_shifts):
        rm = pltpu.roll(x_max, r, 1) if r else x_max
        ra = pltpu.roll(x_avg, r, 1) if r else x_avg
        acc = (acc
               + wm[2 * t: 2 * t + 1, :] * rm
               + wm[2 * t + 1: 2 * t + 2, :] * ra)

    o_ref[...] = jax.nn.sigmoid(acc).astype(o_ref.dtype)   # EUP


def _pick_batch_tile(B, per_batch_bytes, budget_bytes=4 << 20):
    """Largest divisor of B whose input block stays within the VMEM budget."""
    for tb in range(B, 0, -1):
        if B % tb == 0 and tb * per_batch_bytes <= budget_bytes:
            return tb
    return 1


def spatial_attention(x, weight, kernel_size, stride):
    """x: (B, C, H, W); weight: (1, 2, KH, KW). Returns (B, 1, H_out, W_out)."""
    B, C, H, W = x.shape
    KH, KW = kernel_size
    SH, SW = stride
    # Same padding formula as SpatialConv2d.cal_padding_size (int() truncation).
    PH = int((SH * (H - 1) + KH - H) / 2)
    PW = int((SW * (W - 1) + KW - W) / 2)
    H_out = (H + 2 * PH - KH) // SH + 1
    W_out = (W + 2 * PW - KW) // SW + 1

    stride_one = (SH == 1 and SW == 1)
    if stride_one:
        # Conv taps read the un-padded (H, W) grid; the zero halo is realized
        # through per-tap validity masks folded into the weights.
        Hg, Wg = H, W
        x_flat = x.reshape(B, C, Hg * Wg)
    else:
        # Rare path: pad spatially in plain JAX, compute the dense stride-1
        # result in the kernel and subsample afterwards, keeping every
        # in-kernel load / shift unstrided on the lane axis.
        Hg, Wg = H + 2 * PH, W + 2 * PW
        x_flat = jnp.pad(
            x, ((0, 0), (0, 0), (PH, PH), (PW, PW))).reshape(B, C, Hg * Wg)

    N = Hg * Wg
    T = KH * KW
    w32 = weight.astype(jnp.float32)

    # Per-tap "weight * validity mask" rows (2 rows per tap: max- and avg-
    # plane) plus the static lane-roll amount aligning tap (kh, kw) with the
    # output grid:  rolled[o] = plane[(o + src_shift) mod N].
    rows = []
    roll_shifts = []
    hh = np.arange(Hg)[:, None]
    ww = np.arange(Wg)[None, :]
    for kh in range(KH):
        for kw in range(KW):
            if stride_one:
                dh, dw = kh - PH, kw - PW
                valid = ((hh + dh >= 0) & (hh + dh < Hg) &
                         (ww + dw >= 0) & (ww + dw < Wg))
                mask = jnp.asarray(valid.astype(np.float32).reshape(-1))
                src_shift = dh * Wg + dw
            else:
                mask = jnp.ones((N,), jnp.float32)
                src_shift = kh * Wg + kw
            rows.append(w32[0, 0, kh, kw] * mask)   # in-channel 0: max plane
            rows.append(w32[0, 1, kh, kw] * mask)   # in-channel 1: avg plane
            roll_shifts.append(int((-src_shift) % N))
    wm = jnp.stack(rows)                            # (2*T, N) float32

    # Batch tiling: biggest block that divides B and fits the VMEM budget.
    itemsize = jnp.dtype(x.dtype).itemsize
    TB = _pick_batch_tile(B, C * N * itemsize)
    G = B // TB
    x_g = x_flat.reshape(G, TB, C, N)

    # Explicit VMEM limit (v7x has only 64 MiB physical / 32 MiB default scoped).
    vmem_est = 2 * (TB * C * N * itemsize + TB * N * itemsize) + 2 * wm.size * 4
    vmem_limit = int(min(max(vmem_est + (8 << 20), 32 << 20), 60 << 20))

    kernel = functools.partial(
        _spatial_attn_kernel, C=C, roll_shifts=tuple(roll_shifts))

    out = pl.pallas_call(
        kernel,
        out_shape=jax.ShapeDtypeStruct((G, TB, N), x.dtype),
        grid=(G,),
        in_specs=[
            pl.BlockSpec((pl.Squeezed(), TB, C, N), lambda g: (g, 0, 0, 0)),
            pl.BlockSpec((2 * T, N), lambda g: (0, 0)),
        ],
        out_specs=pl.BlockSpec((pl.Squeezed(), TB, N), lambda g: (g, 0, 0)),
        compiler_params=pltpu.CompilerParams(
            dimension_semantics=("parallel",),
            vmem_limit_bytes=vmem_limit),
    )(x_g, wm)

    out = out.reshape(B, 1, Hg, Wg)
    if stride_one:
        return out[:, :, :H_out, :W_out]
    # stride > 1: dense stride-1 result was computed on the padded grid;
    # subsample to the strided output positions (sigmoid is pointwise).
    return out[:, :, ::SH, ::SW][:, :, :H_out, :W_out]


def spatial_attention_reference(x, weight, kernel_size, stride):
    """Plain-JAX reference matching the PyTorch forward."""
    B, C, H, W = x.shape
    KH, KW = kernel_size
    SH, SW = stride
    PH = int((SH * (H - 1) + KH - H) / 2)
    PW = int((SW * (W - 1) + KW - W) / 2)
    x_max = jnp.max(x, axis=1, keepdims=True)
    x_avg = jnp.mean(x, axis=1, keepdims=True)
    xin = jnp.concatenate([x_max, x_avg], axis=1)
    out = lax.conv_general_dilated(
        xin, weight, window_strides=(SH, SW),
        padding=[(PH, PH), (PW, PW)],
        dimension_numbers=("NCHW", "OIHW", "NCHW"))
    return jax.nn.sigmoid(out)


if __name__ == "__main__":
    B, C, H, W = 2, 4, 16, 16
    kernel_size = (3, 3)
    stride = (1, 1)

    key = jax.random.PRNGKey(0)
    kx, kw = jax.random.split(key)
    x = jax.random.normal(kx, (B, C, H, W), dtype=jnp.float32)

    # Deterministic init mimicking kaiming_uniform_(a=sqrt(5)) on (1, 2, KH, KW):
    # bound = 1 / sqrt(fan_in), fan_in = 2 * KH * KW.
    fan_in = 2 * kernel_size[0] * kernel_size[1]
    bound = 1.0 / math.sqrt(fan_in)
    weight = jax.random.uniform(kw, (1, 2, *kernel_size),
                                minval=-bound, maxval=bound, dtype=jnp.float32)
    # NOTE: the PyTorch module also allocates a conv bias, but its forward
    # never passes it to F.conv2d, so no bias is applied here either.

    out = spatial_attention(x, weight, kernel_size, stride)
    out = jax.block_until_ready(out)

    ref = spatial_attention_reference(x, weight, kernel_size, stride)
    assert out.shape == ref.shape == (B, 1, H, W), out.shape
    assert np.allclose(np.asarray(out), np.asarray(ref), atol=1e-5, rtol=1e-5)

    print("KERNEL_OK")
</pallas_src>

<mosaic_0001>
module attributes {stable_mosaic.version = 11 : i64} {
  func.func @_spatial_attn_kernel(%arg0: i32, %arg1: memref<1x2x4x256xf32, #tpu.memory_space<vmem>>, %arg2: memref<18x256xf32, #tpu.memory_space<vmem>>, %arg3: memref<1x2x256xf32, #tpu.memory_space<vmem>>) attributes {dimension_semantics = [#tpu.dimension_semantics<parallel>], iteration_bounds = array<i64: 1>, scalar_prefetch = 0 : i64, scratch_operands = 0 : i64, tpu.core_type = #tpu.core_type<tc>, window_params = [{transform_indices = @transform_0, window_bounds = array<i64: 1, 2, 4, 256>}, {pipeline_mode = #tpu.pipeline_mode<synchronous>, transform_indices = @transform_1, window_bounds = array<i64: 18, 256>}, {transform_indices = @transform_2, window_bounds = array<i64: 1, 2, 256>}]} {
    %c0 = arith.constant 0 : index
    %c0_0 = arith.constant 0 : index
    %c0_1 = arith.constant 0 : index
    %c0_2 = arith.constant 0 : index
    %0 = vector.load %arg1[%c0, %c0_0, %c0_1, %c0_2] : memref<1x2x4x256xf32, #tpu.memory_space<vmem>>, vector<1x2x4x256xf32>
    %1 = vector.shape_cast %0 : vector<1x2x4x256xf32> to vector<2x4x256xf32>
    %cst = arith.constant dense<0xFF800000> : vector<2x256xf32>
    %2 = vector.multi_reduction <maximumf>, %1, %cst [1] : vector<2x4x256xf32> to vector<2x256xf32>
    %cst_3 = arith.constant dense<0.000000e+00> : vector<2x256xf32>
    %3 = vector.multi_reduction <add>, %1, %cst_3 [1] : vector<2x4x256xf32> to vector<2x256xf32>
    %cst_4 = arith.constant 2.500000e-01 : f32
    %4 = vector.broadcast %cst_4 : f32 to vector<2x256xf32>
    %5 = arith.mulf %3, %4 : vector<2x256xf32>
    %c0_5 = arith.constant 0 : index
    %c0_6 = arith.constant 0 : index
    %6 = vector.load %arg2[%c0_5, %c0_6] : memref<18x256xf32, #tpu.memory_space<vmem>>, vector<18x256xf32>
    %cst_7 = arith.constant 0.000000e+00 : f32
    %7 = vector.broadcast %cst_7 : f32 to vector<2x256xf32>
    %c17_i32 = arith.constant 17 : i32
    %8 = tpu.dynamic_rotate %2 by %c17_i32 dim 1 : vector<2x256xf32>, i32 -> vector<2x256xf32>
    %c17_i32_8 = arith.constant 17 : i32
    %9 = tpu.dynamic_rotate %5 by %c17_i32_8 dim 1 : vector<2x256xf32>, i32 -> vector<2x256xf32>
    %10 = vector.extract_strided_slice %6 {offsets = [0, 0], sizes = [1, 256], strides = [1, 1]} : vector<18x256xf32> to vector<1x256xf32>
    %11 = vector.broadcast %10 : vector<1x256xf32> to vector<2x256xf32>
    %12 = arith.mulf %11, %8 : vector<2x256xf32>
    %13 = arith.addf %7, %12 : vector<2x256xf32>
    %14 = vector.extract_strided_slice %6 {offsets = [1, 0], sizes = [1, 256], strides = [1, 1]} : vector<18x256xf32> to vector<1x256xf32>
    %15 = vector.broadcast %14 : vector<1x256xf32> to vector<2x256xf32>
    %16 = arith.mulf %15, %9 : vector<2x256xf32>
    %17 = arith.addf %13, %16 : vector<2x256xf32>
    %c16_i32 = arith.constant 16 : i32
    %18 = tpu.dynamic_rotate %2 by %c16_i32 dim 1 : vector<2x256xf32>, i32 -> vector<2x256xf32>
    %c16_i32_9 = arith.constant 16 : i32
    %19 = tpu.dynamic_rotate %5 by %c16_i32_9 dim 1 : vector<2x256xf32>, i32 -> vector<2x256xf32>
    %20 = vector.extract_strided_slice %6 {offsets = [2, 0], sizes = [1, 256], strides = [1, 1]} : vector<18x256xf32> to vector<1x256xf32>
    %21 = vector.broadcast %20 : vector<1x256xf32> to vector<2x256xf32>
    %22 = arith.mulf %21, %18 : vector<2x256xf32>
    %23 = arith.addf %17, %22 : vector<2x256xf32>
    %24 = vector.extract_strided_slice %6 {offsets = [3, 0], sizes = [1, 256], strides = [1, 1]} : vector<18x256xf32> to vector<1x256xf32>
    %25 = vector.broadcast %24 : vector<1x256xf32> to vector<2x256xf32>
    %26 = arith.mulf %25, %19 : vector<2x256xf32>
    %27 = arith.addf %23, %26 : vector<2x256xf32>
    %c15_i32 = arith.constant 15 : i32
    %28 = tpu.dynamic_rotate %2 by %c15_i32 dim 1 : vector<2x256xf32>, i32 -> vector<2x256xf32>
    %c15_i32_10 = arith.constant 15 : i32
    %29 = tpu.dynamic_rotate %5 by %c15_i32_10 dim 1 : vector<2x256xf32>, i32 -> vector<2x256xf32>
    %30 = vector.extract_strided_slice %6 {offsets = [4, 0], sizes = [1, 256], strides = [1, 1]} : vector<18x256xf32> to vector<1x256xf32>
    %31 = vector.broadcast %30 : vector<1x256xf32> to vector<2x256xf32>
    %32 = arith.mulf %31, %28 : vector<2x256xf32>
    %33 = arith.addf %27, %32 : vector<2x256xf32>
    %34 = vector.extract_strided_slice %6 {offsets = [5, 0], sizes = [1, 256], strides = [1, 1]} : vector<18x256xf32> to vector<1x256xf32>
    %35 = vector.broadcast %34 : vector<1x256xf32> to vector<2x256xf32>
    %36 = arith.mulf %35, %29 : vector<2x256xf32>
    %37 = arith.addf %33, %36 : vector<2x256xf32>
    %c1_i32 = arith.constant 1 : i32
    %38 = tpu.dynamic_rotate %2 by %c1_i32 dim 1 : vector<2x256xf32>, i32 -> vector<2x256xf32>
    %c1_i32_11 = arith.constant 1 : i32
    %39 = tpu.dynamic_rotate %5 by %c1_i32_11 dim 1 : vector<2x256xf32>, i32 -> vector<2x256xf32>
    %40 = vector.extract_strided_slice %6 {offsets = [6, 0], sizes = [1, 256], strides = [1, 1]} : vector<18x256xf32> to vector<1x256xf32>
    %41 = vector.broadcast %40 : vector<1x256xf32> to vector<2x256xf32>
    %42 = arith.mulf %41, %38 : vector<2x256xf32>
    %43 = arith.addf %37, %42 : vector<2x256xf32>
    %44 = vector.extract_strided_slice %6 {offsets = [7, 0], sizes = [1, 256], strides = [1, 1]} : vector<18x256xf32> to vector<1x256xf32>
    %45 = vector.broadcast %44 : vector<1x256xf32> to vector<2x256xf32>
    %46 = arith.mulf %45, %39 : vector<2x256xf32>
    %47 = arith.addf %43, %46 : vector<2x256xf32>
    %48 = vector.extract_strided_slice %6 {offsets = [8, 0], sizes = [1, 256], strides = [1, 1]} : vector<18x256xf32> to vector<1x256xf32>
    %49 = vector.broadcast %48 : vector<1x256xf32> to vector<2x256xf32>
    %50 = arith.mulf %49, %2 : vector<2x256xf32>
    %51 = arith.addf %47, %50 : vector<2x256xf32>
    %52 = vector.extract_strided_slice %6 {offsets = [9, 0], sizes = [1, 256], strides = [1, 1]} : vector<18x256xf32> to vector<1x256xf32>
    %53 = vector.broadcast %52 : vector<1x256xf32> to vector<2x256xf32>
    %54 = arith.mulf %53, %5 : vector<2x256xf32>
    %55 = arith.addf %51, %54 : vector<2x256xf32>
    %c255_i32 = arith.constant 255 : i32
    %56 = tpu.dynamic_rotate %2 by %c255_i32 dim 1 : vector<2x256xf32>, i32 -> vector<2x256xf32>
    %c255_i32_12 = arith.constant 255 : i32
    %57 = tpu.dynamic_rotate %5 by %c255_i32_12 dim 1 : vector<2x256xf32>, i32 -> vector<2x256xf32>
    %58 = vector.extract_strided_slice %6 {offsets = [10, 0], sizes = [1, 256], strides = [1, 1]} : vector<18x256xf32> to vector<1x256xf32>
    %59 = vector.broadcast %58 : vector<1x256xf32> to vector<2x256xf32>
    %60 = arith.mulf %59, %56 : vector<2x256xf32>
    %61 = arith.addf %55, %60 : vector<2x256xf32>
    %62 = vector.extract_strided_slice %6 {offsets = [11, 0], sizes = [1, 256], strides = [1, 1]} : vector<18x256xf32> to vector<1x256xf32>
    %63 = vector.broadcast %62 : vector<1x256xf32> to vector<2x256xf32>
    %64 = arith.mulf %63, %57 : vector<2x256xf32>
    %65 = arith.addf %61, %64 : vector<2x256xf32>
    %c241_i32 = arith.constant 241 : i32
    %66 = tpu.dynamic_rotate %2 by %c241_i32 dim 1 : vector<2x256xf32>, i32 -> vector<2x256xf32>
    %c241_i32_13 = arith.constant 241 : i32
    %67 = tpu.dynamic_rotate %5 by %c241_i32_13 dim 1 : vector<2x256xf32>, i32 -> vector<2x256xf32>
    %68 = vector.extract_strided_slice %6 {offsets = [12, 0], sizes = [1, 256], strides = [1, 1]} : vector<18x256xf32> to vector<1x256xf32>
    %69 = vector.broadcast %68 : vector<1x256xf32> to vector<2x256xf32>
    %70 = arith.mulf %69, %66 : vector<2x256xf32>
    %71 = arith.addf %65, %70 : vector<2x256xf32>
    %72 = vector.extract_strided_slice %6 {offsets = [13, 0], sizes = [1, 256], strides = [1, 1]} : vector<18x256xf32> to vector<1x256xf32>
    %73 = vector.broadcast %72 : vector<1x256xf32> to vector<2x256xf32>
    %74 = arith.mulf %73, %67 : vector<2x256xf32>
    %75 = arith.addf %71, %74 : vector<2x256xf32>
    %c240_i32 = arith.constant 240 : i32
    %76 = tpu.dynamic_rotate %2 by %c240_i32 dim 1 : vector<2x256xf32>, i32 -> vector<2x256xf32>
    %c240_i32_14 = arith.constant 240 : i32
    %77 = tpu.dynamic_rotate %5 by %c240_i32_14 dim 1 : vector<2x256xf32>, i32 -> vector<2x256xf32>
    %78 = vector.extract_strided_slice %6 {offsets = [14, 0], sizes = [1, 256], strides = [1, 1]} : vector<18x256xf32> to vector<1x256xf32>
    %79 = vector.broadcast %78 : vector<1x256xf32> to vector<2x256xf32>
    %80 = arith.mulf %79, %76 : vector<2x256xf32>
    %81 = arith.addf %75, %80 : vector<2x256xf32>
    %82 = vector.extract_strided_slice %6 {offsets = [15, 0], sizes = [1, 256], strides = [1, 1]} : vector<18x256xf32> to vector<1x256xf32>
    %83 = vector.broadcast %82 : vector<1x256xf32> to vector<2x256xf32>
    %84 = arith.mulf %83, %77 : vector<2x256xf32>
    %85 = arith.addf %81, %84 : vector<2x256xf32>
    %c239_i32 = arith.constant 239 : i32
    %86 = tpu.dynamic_rotate %2 by %c239_i32 dim 1 : vector<2x256xf32>, i32 -> vector<2x256xf32>
    %c239_i32_15 = arith.constant 239 : i32
    %87 = tpu.dynamic_rotate %5 by %c239_i32_15 dim 1 : vector<2x256xf32>, i32 -> vector<2x256xf32>
    %88 = vector.extract_strided_slice %6 {offsets = [16, 0], sizes = [1, 256], strides = [1, 1]} : vector<18x256xf32> to vector<1x256xf32>
    %89 = vector.broadcast %88 : vector<1x256xf32> to vector<2x256xf32>
    %90 = arith.mulf %89, %86 : vector<2x256xf32>
    %91 = arith.addf %85, %90 : vector<2x256xf32>
    %92 = vector.extract_strided_slice %6 {offsets = [17, 0], sizes = [1, 256], strides = [1, 1]} : vector<18x256xf32> to vector<1x256xf32>
    %93 = vector.broadcast %92 : vector<1x256xf32> to vector<2x256xf32>
    %94 = arith.mulf %93, %87 : vector<2x256xf32>
    %95 = arith.addf %91, %94 : vector<2x256xf32>
    %96 = arith.negf %95 : vector<2x256xf32>
    %97 = math.exp %96 : vector<2x256xf32>
    %cst_16 = arith.constant 1.000000e+00 : f32
    %98 = vector.broadcast %cst_16 : f32 to vector<2x256xf32>
    %99 = arith.addf %98, %97 : vector<2x256xf32>
    %100 = arith.divf %98, %99 : vector<2x256xf32>
    %c0_17 = arith.constant 0 : index
    %c0_18 = arith.constant 0 : index
    %c0_19 = arith.constant 0 : index
    %101 = vector.load %arg3[%c0_17, %c0_18, %c0_19] : memref<1x2x256xf32, #tpu.memory_space<vmem>>, vector<1x2x256xf32>
    %102 = vector.shape_cast %101 : vector<1x2x256xf32> to vector<2x256xf32>
    %103 = vector.shape_cast %100 : vector<2x256xf32> to vector<1x2x256xf32>
    tpu.vector_store %arg3[%c0_17, %c0_18, %c0_19], %103 {strides = array<i32>} : memref<1x2x256xf32, #tpu.memory_space<vmem>>, vector<1x2x256xf32>,
    return
  }
  func.func @transform_0(%arg0: i32) -> (i32, i32, i32, i32) {
    %c0_i32 = arith.constant 0 : i32
    %c0_i32_0 = arith.constant 0 : i32
    %c0_i32_1 = arith.constant 0 : i32
    %c0_i32_2 = arith.constant 0 : i32
    return %arg0, %c0_i32, %c0_i32_0, %c0_i32_1 : i32, i32, i32, i32
  }
  func.func @transform_1(%arg0: i32) -> (i32, i32) {
    %c0_i32 = arith.constant 0 : i32
    %c0_i32_0 = arith.constant 0 : i32
    %c0_i32_1 = arith.constant 0 : i32
    return %c0_i32, %c0_i32_0 : i32, i32
  }
  func.func @transform_2(%arg0: i32) -> (i32, i32, i32) {
    %c0_i32 = arith.constant 0 : i32
    %c0_i32_0 = arith.constant 0 : i32
    %c0_i32_1 = arith.constant 0 : i32
    return %arg0, %c0_i32, %c0_i32_0 : i32, i32, i32
  }
}

</mosaic_0001>

<llo_original>
// kernel: tpu_custom_call.1
$region0: #{tpu_custom_call.1}
  #allocation0 [shape = 'u32[]', space=smem, size = 0x4, offset = 0x4, fixed_abs, tag = 'smem constant byte address 0x4 - core index']
  #allocation1 [shape = 'u32[72,128]{1,0:T(1,128)}', space=vmem, size = 0x9000, scoped, tag = 'internal scratch']
  %s0 = inlined_call_operand.hbm [shape: f32[1,2,4,256], index: 0, kind: input, shape index: {}]
  %s1 = inlined_call_operand.hbm [shape: f32[18,256], index: 1, kind: input, shape index: {}]
  %s2 = inlined_call_operand.hbm [shape: f32[1,2,256], index: 2, kind: output, shape index: {}]
  %s3 = sld [smem:[#allocation0]]
  $region26: #{tpu_custom_call.1} parent=0
    _
  %s5 = ssub.s32 1, %s3
  %s6 = scalar_select 0, %s5, %s3
  $region1: #{tpu_custom_call.1} parent=0
    #allocation2 [shape = 'u8[8192]{0}', space=vmem, size = 0x2000, scoped, tag = 'input window, operand 0, single buffered']
    #allocation3 [shape = 's32[1]{0}', space=sflag, size = 0x4, scoped, tag = 'scoped memory for tpu_custom_call.1']
    #allocation4 [shape = 's32[1]{0}', space=sflag, size = 0x4, scoped, tag = 'scoped memory for tpu_custom_call.1']
    #allocation5 [shape = 'u8[24576]{0}', space=vmem, size = 0x6000, scoped, tag = 'input window, operand 1, single buffered']
    #allocation6 [shape = 's32[1]{0}', space=sflag, size = 0x4, scoped, tag = 'scoped memory for tpu_custom_call.1']
    #allocation7 [shape = 'u8[2048]{0}', space=vmem, size = 0x800, scoped, tag = 'output window, operand 0, single buffered']
    %7 = vsyncpa [#allocation3], 0
    %8 = vsyncpa [#allocation6], 0
    %9 = vsyncpa [#allocation4], 0
    // Predicated region
    $region2: #{tpu_custom_call.1} parent=1 // pred_check
      _
    $region3: #{tpu_custom_call.1} parent=1 // pred_check_branch
      %11 = sbr.rel (0) target = $region5
    $region4: #{tpu_custom_call.1} parent=1 // pred_region
      %13 = vsyncadd [#allocation3], 0
      %s14 = sshll.u32 %s0, 4
      %s15 = int_to_ptr.hbm [resolvable:$true] %s14
      %s16 = sshll.u32 [#allocation2], 4
      %s17 = int_to_ptr.vmem [resolvable:$true] %s16
      %22 = dma.hbm_to_vmem [thread:$0]  %s15, 256, %s17, [#allocation3], 128, 128, 8
    $region5: #{tpu_custom_call.1} parent=1 // pred_fallthru
      _
    // Predicated region
    $region6: #{tpu_custom_call.1} parent=1 // pred_check
      _
    $region7: #{tpu_custom_call.1} parent=1 // pred_check_branch
      %24 = sbr.rel (0) target = $region9
    $region8: #{tpu_custom_call.1} parent=1 // pred_region
      %26 = vsyncadd [#allocation6], 0
      %s27 = sshll.u32 %s1, 4
      %s28 = int_to_ptr.hbm [resolvable:$true] %s27
      %s29 = sshll.u32 [#allocation5], 4
      %s30 = int_to_ptr.vmem [resolvable:$true] %s29
      %35 = dma.hbm_to_vmem [thread:$0]  %s28, 768, %s30, [#allocation6], 256, 256, 16
    $region9: #{tpu_custom_call.1} parent=1 // pred_fallthru
      _
    // Predicated region
    $region10: #{tpu_custom_call.1} parent=1 // pred_check
      _
    $region11: #{tpu_custom_call.1} parent=1 // pred_check_branch
      %37 = sbr.rel (0) target = $region13
    $region12: #{tpu_custom_call.1} parent=1 // pred_region
      %39 = dma.done [#allocation3], 256
    $region13: #{tpu_custom_call.1} parent=1 // pred_fallthru
      _
    // Predicated region
    $region14: #{tpu_custom_call.1} parent=1 // pred_check
      _
    $region15: #{tpu_custom_call.1} parent=1 // pred_check_branch
      %41 = sbr.rel (0) target = $region17
    $region16: #{tpu_custom_call.1} parent=1 // pred_region
      %43 = dma.done [#allocation6], 768
    $region17: #{tpu_custom_call.1} parent=1 // pred_fallthru
      _
    %v44 = vld [vmem:[#allocation2] sm:$0xff]
    %v45 = vld [vmem:[#allocation2 + $0x8] sm:$0xff]
    %48 = vst [vmem:[#allocation1] ss:$2 sm:$0xff] %v44
    %v49 = vld.sshfl [vmem:[#allocation1] sm:$0xff pattern:$0x75316420]
    %v50 = vld.sshfl [vmem:[#allocation1 + $0x8] sm:$0xff pattern:$0x75316420]
    %s51 = scalar_lea.vmem [#allocation1], 16
    %52 = vst [vmem:[%s51] ss:$2 sm:$0xff] %v45
    %v53 = vld.sshfl [vmem:[#allocation1 + $0x10] sm:$0xff pattern:$0x75316420]
    %v54 = vld.sshfl [vmem:[#allocation1 + $0x18] sm:$0xff pattern:$0x75316420]
    %vm59 = vcmask 1043456
    %v60 = vsel %vm59, %v49, -inf
    %v61 = vrot.slane %v60, 4
    %v62 = vmax.f32 %v60, %v61
    %v63 = vrot.slane %v62, 2
    %v64 = vmax.f32 %v62, %v63
    %v65 = vrot.slane %v64, 1
    %v66 = vmax.f32 %v64, %v65
    %v67 = vsel %vm59, %v50, -inf
    %v68 = vrot.slane %v67, 4
    %v69 = vmax.f32 %v67, %v68
    %v70 = vrot.slane %v69, 2
    %v71 = vmax.f32 %v69, %v70
    %v72 = vrot.slane %v71, 1
    %v73 = vmax.f32 %v71, %v72
    %v74 = vsel %vm59, %v53, -inf
    %v75 = vrot.slane %v74, 4
    %v76 = vmax.f32 %v74, %v75
    %v77 = vrot.slane %v76, 2
    %v78 = vmax.f32 %v76, %v77
    %v79 = vrot.slane %v78, 1
    %v80 = vmax.f32 %v78, %v79
    %v81 = vsel %vm59, %v54, -inf
    %v82 = vrot.slane %v81, 4
    %v83 = vmax.f32 %v81, %v82
    %v84 = vrot.slane %v83, 2
    %v85 = vmax.f32 %v83, %v84
    %v86 = vrot.slane %v85, 1
    %v87 = vmax.f32 %v85, %v86
    %88 = vst [vmem:[#allocation1] ss:$2 sm:$0xff] %v44
    %v89 = vld.sshfl [vmem:[#allocation1] sm:$0xff pattern:$0x75316420]
    %v90 = vld.sshfl [vmem:[#allocation1 + $0x8] sm:$0xff pattern:$0x75316420]
    %s91 = scalar_lea.vmem [#allocation1], 16
    %92 = vst [vmem:[%s91] ss:$2 sm:$0xff] %v45
    %v93 = vld.sshfl [vmem:[#allocation1 + $0x10] sm:$0xff pattern:$0x75316420]
    %v94 = vld.sshfl [vmem:[#allocation1 + $0x18] sm:$0xff pattern:$0x75316420]
    %v99 = vsel %vm59, %v89, 0.0
    %v100 = vrot.slane %v99, 4
    %v101 = vadd.f32 %v99, %v100
    %v102 = vrot.slane %v101, 2
    %v103 = vadd.f32 %v101, %v102
    %v104 = vrot.slane %v103, 1
    %v105 = vadd.f32 %v103, %v104
    %v106 = vsel %vm59, %v90, 0.0
    %v107 = vrot.slane %v106, 4
    %v108 = vadd.f32 %v106, %v107
    %v109 = vrot.slane %v108, 2
    %v110 = vadd.f32 %v108, %v109
    %v111 = vrot.slane %v110, 1
    %v112 = vadd.f32 %v110, %v111
    %v113 = vsel %vm59, %v93, 0.0
    %v114 = vrot.slane %v113, 4
    %v115 = vadd.f32 %v113, %v114
    %v116 = vrot.slane %v115, 2
    %v117 = vadd.f32 %v115, %v116
    %v118 = vrot.slane %v117, 1
    %v119 = vadd.f32 %v117, %v118
    %v120 = vsel %vm59, %v94, 0.0
    %v121 = vrot.slane %v120, 4
    %v122 = vadd.f32 %v120, %v121
    %v123 = vrot.slane %v122, 2
    %v124 = vadd.f32 %v122, %v123
    %v125 = vrot.slane %v124, 1
    %v126 = vadd.f32 %v124, %v125
    %v127 = vmul.f32 %v105, 0.25
    %v128 = vmul.f32 %v112, 0.25
    %v129 = vmul.f32 %v119, 0.25
    %v130 = vmul.f32 %v126, 0.25
    %v131 = vld [vmem:[#allocation5] sm:$0xff]
    %v132 = vld [vmem:[#allocation5 + $0x8] sm:$0xff]
    %v133 = vld [vmem:[#allocation5 + $0x10] sm:$0xff]
    %v134 = vld [vmem:[#allocation5 + $0x18] sm:$0xff]
    %v135 = vld [vmem:[#allocation5 + $0x20] sm:$0x3]
    %v136 = vld [vmem:[#allocation5 + $0x28] sm:$0x3]
    %vm141 = vcmask 1041409
    %v142 = vsel %vm141, %v80, %v66
    %v143 = vsel %vm141, %v87, %v73
    %146 = vrot.lane.b32.xlu0 %v142, 17
    %v147 = vpop.permute.xlu0 %146
    %148 = vrot.lane.b32.xlu0 %v143, 17
    %v149 = vpop.permute.xlu0 %148
    %v150 = vlaneseq
    %v151 = vand.u32 %v150, 127
    %vm152 = vcmp.lt.s32.totalorder %v151, 17
    %v153 = vsel %vm152, %v147, %v149
    %v154 = vsel %vm152, %v149, %v147
    %v159 = vsel %vm141, %v129, %v127
    %v160 = vsel %vm141, %v130, %v128
    %163 = vrot.lane.b32.xlu0 %v159, 17
    %v164 = vpop.permute.xlu0 %163
    %165 = vrot.lane.b32.xlu0 %v160, 17
    %v166 = vpop.permute.xlu0 %165
    %v167 = vsel %vm152, %v164, %v166
    %v168 = vsel %vm152, %v166, %v164
    %v169 = vperm.slane %v131, 0
    %v170 = vperm.slane %v132, 0
    %v171 = vmul.f32 %v169, %v154
    %v172 = vmul.f32 %v170, %v153
    %v173 = vadd.f32 %v171, 0.0
    %v174 = vadd.f32 %v172, 0.0
    %v175 = vperm.slane %v131, 1
    %v176 = vperm.slane %v132, 1
    %v177 = vmul.f32 %v175, %v168
    %v178 = vmul.f32 %v176, %v167
    %v179 = vadd.f32 %v173, %v177
    %v180 = vadd.f32 %v174, %v178
    %181 = vrot.lane.b32.xlu0 %v142, 16
    %v182 = vpop.permute.xlu0 %181
    %183 = vrot.lane.b32.xlu0 %v143, 16
    %v184 = vpop.permute.xlu0 %183
    %vm185 = vcmp.lt.s32.totalorder %v151, 16
    %v186 = vsel %vm185, %v182, %v184
    %v187 = vsel %vm185, %v184, %v182
    %188 = vrot.lane.b32.xlu0 %v159, 16
    %v189 = vpop.permute.xlu0 %188
    %190 = vrot.lane.b32.xlu0 %v160, 16
    %v191 = vpop.permute.xlu0 %190
    %v192 = vsel %vm185, %v189, %v191
    %v193 = vsel %vm185, %v191, %v189
    %v194 = vperm.slane %v131, 2
    %v195 = vperm.slane %v132, 2
    %v196 = vmul.f32 %v194, %v187
    %v197 = vmul.f32 %v195, %v186
    %v198 = vadd.f32 %v179, %v196
    %v199 = vadd.f32 %v180, %v197
    %v200 = vperm.slane %v131, 3
    %v201 = vperm.slane %v132, 3
    %v202 = vmul.f32 %v200, %v193
    %v203 = vmul.f32 %v201, %v192
    %v204 = vadd.f32 %v198, %v202
    %v205 = vadd.f32 %v199, %v203
    %206 = vrot.lane.b32.xlu0 %v142, 15
    %v207 = vpop.permute.xlu0 %206
    %208 = vrot.lane.b32.xlu0 %v143, 15
    %v209 = vpop.permute.xlu0 %208
    %vm210 = vcmp.lt.s32.totalorder %v151, 15
    %v211 = vsel %vm210, %v207, %v209
    %v212 = vsel %vm210, %v209, %v207
    %213 = vrot.lane.b32.xlu0 %v159, 15
    %v214 = vpop.permute.xlu0 %213
    %215 = vrot.lane.b32.xlu0 %v160, 15
    %v216 = vpop.permute.xlu0 %215
    %v217 = vsel %vm210, %v214, %v216
    %v218 = vsel %vm210, %v216, %v214
    %v219 = vperm.slane %v131, 4
    %v220 = vperm.slane %v132, 4
    %v221 = vmul.f32 %v219, %v212
    %v222 = vmul.f32 %v220, %v211
    %v223 = vadd.f32 %v204, %v221
    %v224 = vadd.f32 %v205, %v222
    %v225 = vperm.slane %v131, 5
    %v226 = vperm.slane %v132, 5
    %v227 = vmul.f32 %v225, %v218
    %v228 = vmul.f32 %v226, %v217
    %v229 = vadd.f32 %v223, %v227
    %v230 = vadd.f32 %v224, %v228
    %231 = vrot.lane.b32.xlu0 %v142, 1
    %v232 = vpop.permute.xlu0 %231
    %233 = vrot.lane.b32.xlu0 %v143, 1
    %v234 = vpop.permute.xlu0 %233
    %vm235 = vcmp.lt.s32.totalorder %v151, 1
    %v236 = vsel %vm235, %v232, %v234
    %v237 = vsel %vm235, %v234, %v232
    %238 = vrot.lane.b32.xlu0 %v159, 1
    %v239 = vpop.permute.xlu0 %238
    %240 = vrot.lane.b32.xlu0 %v160, 1
    %v241 = vpop.permute.xlu0 %240
    %v242 = vsel %vm235, %v239, %v241
    %v243 = vsel %vm235, %v241, %v239
    %v244 = vperm.slane %v131, 6
    %v245 = vperm.slane %v132, 6
    %v246 = vmul.f32 %v244, %v237
    %v247 = vmul.f32 %v245, %v236
    %v248 = vadd.f32 %v229, %v246
    %v249 = vadd.f32 %v230, %v247
    %v250 = vperm.slane %v131, 7
    %v251 = vperm.slane %v132, 7
    %v252 = vmul.f32 %v250, %v243
    %v253 = vmul.f32 %v251, %v242
    %v254 = vadd.f32 %v248, %v252
    %v255 = vadd.f32 %v249, %v253
    %v256 = vperm.slane %v133, 0
    %v257 = vperm.slane %v134, 0
    %v258 = vmul.f32 %v256, %v142
    %v259 = vmul.f32 %v257, %v143
    %v260 = vadd.f32 %v254, %v258
    %v261 = vadd.f32 %v255, %v259
    %v262 = vperm.slane %v133, 1
    %v263 = vperm.slane %v134, 1
    %v264 = vmul.f32 %v262, %v159
    %v265 = vmul.f32 %v263, %v160
    %v266 = vadd.f32 %v260, %v264
    %v267 = vadd.f32 %v261, %v265
    %268 = vrot.lane.b32.xlu0 %v142, 127
    %v269 = vpop.permute.xlu0 %268
    %270 = vrot.lane.b32.xlu0 %v143, 127
    %v271 = vpop.permute.xlu0 %270
    %vm272 = vcmp.lt.s32.totalorder %v151, 127
    %v273 = vsel %vm272, %v269, %v271
    %v274 = vsel %vm272, %v271, %v269
    %275 = vrot.lane.b32.xlu0 %v159, 127
    %v276 = vpop.permute.xlu0 %275
    %277 = vrot.lane.b32.xlu0 %v160, 127
    %v278 = vpop.permute.xlu0 %277
    %v279 = vsel %vm272, %v276, %v278
    %v280 = vsel %vm272, %v278, %v276
    %v281 = vperm.slane %v133, 2
    %v282 = vperm.slane %v134, 2
    %v283 = vmul.f32 %v281, %v273
    %v284 = vmul.f32 %v282, %v274
    %v285 = vadd.f32 %v266, %v283
    %v286 = vadd.f32 %v267, %v284
    %v287 = vperm.slane %v133, 3
    %v288 = vperm.slane %v134, 3
    %v289 = vmul.f32 %v287, %v279
    %v290 = vmul.f32 %v288, %v280
    %v291 = vadd.f32 %v285, %v289
    %v292 = vadd.f32 %v286, %v290
    %293 = vrot.lane.b32.xlu0 %v142, 113
    %v294 = vpop.permute.xlu0 %293
    %295 = vrot.lane.b32.xlu0 %v143, 113
    %v296 = vpop.permute.xlu0 %295
    %vm297 = vcmp.lt.s32.totalorder %v151, 113
    %v298 = vsel %vm297, %v294, %v296
    %v299 = vsel %vm297, %v296, %v294
    %300 = vrot.lane.b32.xlu0 %v159, 113
    %v301 = vpop.permute.xlu0 %300
    %302 = vrot.lane.b32.xlu0 %v160, 113
    %v303 = vpop.permute.xlu0 %302
    %v304 = vsel %vm297, %v301, %v303
    %v305 = vsel %vm297, %v303, %v301
    %v306 = vperm.slane %v133, 4
    %v307 = vperm.slane %v134, 4
    %v308 = vmul.f32 %v306, %v298
    %v309 = vmul.f32 %v307, %v299
    %v310 = vadd.f32 %v291, %v308
    %v311 = vadd.f32 %v292, %v309
    %v312 = vperm.slane %v133, 5
    %v313 = vperm.slane %v134, 5
    %v314 = vmul.f32 %v312, %v304
    %v315 = vmul.f32 %v313, %v305
    %v316 = vadd.f32 %v310, %v314
    %v317 = vadd.f32 %v311, %v315
    %318 = vrot.lane.b32.xlu0 %v142, 112
    %v319 = vpop.permute.xlu0 %318
    %320 = vrot.lane.b32.xlu0 %v143, 112
    %v321 = vpop.permute.xlu0 %320
    %vm322 = vcmp.lt.s32.totalorder %v151, 112
    %v323 = vsel %vm322, %v319, %v321
    %v324 = vsel %vm322, %v321, %v319
    %325 = vrot.lane.b32.xlu0 %v159, 112
    %v326 = vpop.permute.xlu0 %325
    %327 = vrot.lane.b32.xlu0 %v160, 112
    %v328 = vpop.permute.xlu0 %327
    %v329 = vsel %vm322, %v326, %v328
    %v330 = vsel %vm322, %v328, %v326
    %v331 = vperm.slane %v133, 6
    %v332 = vperm.slane %v134, 6
    %v333 = vmul.f32 %v331, %v323
    %v334 = vmul.f32 %v332, %v324
    %v335 = vadd.f32 %v316, %v333
    %v336 = vadd.f32 %v317, %v334
    %v337 = vperm.slane %v133, 7
    %v338 = vperm.slane %v134, 7
    %v339 = vmul.f32 %v337, %v329
    %v340 = vmul.f32 %v338, %v330
    %v341 = vadd.f32 %v335, %v339
    %v342 = vadd.f32 %v336, %v340
    %343 = vrot.lane.b32.xlu0 %v142, 111
    %v344 = vpop.permute.xlu0 %343
    %345 = vrot.lane.b32.xlu0 %v143, 111
    %v346 = vpop.permute.xlu0 %345
    %vm347 = vcmp.lt.s32.totalorder %v151, 111
    %v348 = vsel %vm347, %v344, %v346
    %v349 = vsel %vm347, %v346, %v344
    %350 = vrot.lane.b32.xlu0 %v159, 111
    %v351 = vpop.permute.xlu0 %350
    %352 = vrot.lane.b32.xlu0 %v160, 111
    %v353 = vpop.permute.xlu0 %352
    %v354 = vsel %vm347, %v351, %v353
    %v355 = vsel %vm347, %v353, %v351
    %v356 = vperm.slane %v135, 0
    %v357 = vperm.slane %v136, 0
    %v358 = vmul.f32 %v356, %v348
    %v359 = vmul.f32 %v357, %v349
    %v360 = vadd.f32 %v341, %v358
    %v361 = vadd.f32 %v342, %v359
    %v362 = vperm.slane %v135, 1
    %v363 = vperm.slane %v136, 1
    %v364 = vmul.f32 %v362, %v354
    %v365 = vmul.f32 %v363, %v355
    %v366 = vadd.f32 %v360, %v364
    %v367 = vadd.f32 %v361, %v365
    %v368 = vxor.u32 %v366, 2147483648
    %v369 = vxor.u32 %v367, 2147483648
    %v370 = vmul.f32 %v368, 1.442695
    %v371 = vpow.pop %v370
    %v372 = vmul.f32 %v369, 1.442695
    %v373 = vpow.pop %v372
    %v374 = vadd.f32 %v371, 1.0
    %v375 = vadd.f32 %v373, 1.0
    %v376 = vrcp.pop %v374
    %v377 = vmul.f32 %v374, %v376
    %v378 = vsub.f32 1.0, %v377
    %v379 = vmul.f32 %v376, %v378
    %v380 = vadd.f32 %v376, %v379
    %vm381 = vweird.f32 %v374
    %vm382 = vweird.f32 %v376
    %vm383 = vmor %vm381, %vm382
    %v384 = vsel %vm383, %v376, %v380
    %v385 = vand.u32 2147483647, %v374
    %vm386 = vcmp.eq.f32.partialorder %v385, 8.507059e+37
    %v387 = vand.u32 %v374, 2147483648
    %v388 = vor.u32 1.1754944e-38, %v387
    %v389 = vsel %vm386, %v388, %v384
    %v390 = vmul.f32 1.0, %v389
    %v391 = vrcp.pop %v375
    %v392 = vmul.f32 %v375, %v391
    %v393 = vsub.f32 1.0, %v392
    %v394 = vmul.f32 %v391, %v393
    %v395 = vadd.f32 %v391, %v394
    %vm396 = vweird.f32 %v375
    %vm397 = vweird.f32 %v391
    %vm398 = vmor %vm396, %vm397
    %v399 = vsel %vm398, %v391, %v395
    %v400 = vand.u32 2147483647, %v375
    %vm401 = vcmp.eq.f32.partialorder %v400, 8.507059e+37
    %v402 = vand.u32 %v375, 2147483648
    %v403 = vor.u32 1.1754944e-38, %v402
    %v404 = vsel %vm401, %v403, %v399
    %v405 = vmul.f32 1.0, %v404
    %v408 = vrot.slane %v405, 6
    %vm409 = vcmask 1041408
    %v410 = vsel %vm409, %v390, %v408
    %412 = vst [vmem:[#allocation7] sm:$0xf] %v410
    // Predicated region
    $region18: #{tpu_custom_call.1} parent=1 // pred_check
      _
    $region19: #{tpu_custom_call.1} parent=1 // pred_check_branch
      %414 = sbr.rel (0) target = $region21
    $region20: #{tpu_custom_call.1} parent=1 // pred_region
      %416 = vsyncadd [#allocation4], 0
      %s418 = sshll.u32 [#allocation7], 4
      %s419 = int_to_ptr.vmem [resolvable:$true] %s418
      %s420 = sshll.u32 %s2, 4
      %s421 = int_to_ptr.hbm [resolvable:$true] %s420
      %423 = dma.vmem_to_hbm [thread:$0]  %s419, 64, %s421, [#allocation4]
    $region21: #{tpu_custom_call.1} parent=1 // pred_fallthru
      _
    // Predicated region
    $region22: #{tpu_custom_call.1} parent=1 // pred_check
      _
    $region23: #{tpu_custom_call.1} parent=1 // pred_check_branch
      %425 = sbr.rel (0) target = $region25
    $region24: #{tpu_custom_call.1} parent=1 // pred_region
      %427 = dma.done [#allocation4], 64
    $region25: #{tpu_custom_call.1} parent=1 // pred_fallthru
      _
    %428 = vsyncpa [#allocation3], 1
    %429 = vsyncpa [#allocation6], 1
    %430 = vsyncpa [#allocation4], 1

</llo_original>
